<compile_context>
chip_gen: v5e
topology: v5e:2x2
jax: 0.10.0
libtpu: 0.0.40
codegen_flags: <defaults>
</compile_context>

<pallas_src>
import jax
import jax.numpy as jnp
from jax.experimental import pallas as pl
from jax.experimental.pallas import tpu as pltpu


def _round_up(n, m):
    return ((n + m - 1) // m) * m


def _energy_mlp_kernel(x_ref, w1_ref, b1_ref, w2t_ref, b2_ref, o_ref):
    # h = relu(x @ W1 + b1): f32 MXU matmul (K = input_size is tiny; the kernel
    # is HBM-bound on x, so f32 MXU passes are free and keep reference accuracy).
    h = jnp.dot(x_ref[...], w1_ref[...], preferred_element_type=jnp.float32)
    h = jnp.maximum(h + b1_ref[...], 0.0)                      # (TB, H) f32

    # y = h @ W2 with N=1  ==>  VPU multiply + XLU lane reduce.
    y = jnp.sum(h * w2t_ref[...], axis=-1)                     # (TB,)
    y = y + b2_ref[0, 0]                                       # scalar bias from SMEM

    # Lane-dense store: batch lives on the lane axis of a (1, TB) output block.
    o_ref[...] = y.reshape(o_ref.shape).astype(o_ref.dtype)


def energy_predictor_forward(x, w1, b1, w2, b2, *, tb_max=8192):
    """Fused MLP forward: relu(x @ w1 + b1) @ w2 + b2.

    x : (B, D) float32
    w1: (D, H) float32,  b1: (1, H) float32
    w2: (H, 1) float32,  b2: (1, 1) float32
    returns (B, 1) float32
    """
    B, D = x.shape
    H = w1.shape[1]

    # Tile choice: a multiple of 128 (legal lane-dense output block even on the
    # partial-edge path), capped so big batches still produce >= 2 grid steps
    # for v7x megacore sharding.  If the whole batch fits in one tile, use the
    # exact array extent (full-extent block => no (8, 128) constraint).
    tb = min(tb_max, _round_up(pl.cdiv(B, 2), 128))
    if tb >= B:
        tb = B
    n_tiles = pl.cdiv(B, tb)

    b1_2d = b1.reshape(1, H).astype(jnp.float32)
    w2t = w2.reshape(1, H).astype(jnp.float32)       # W2^T for the VPU reduce
    b2_2d = b2.reshape(1, 1).astype(jnp.float32)

    param_bytes = (D * H + H + H + 1) * 4
    cost = pl.CostEstimate(
        flops=2 * B * D * H + 4 * B * H,              # layer-1 matmul + epilogue
        transcendentals=0,
        bytes_accessed=B * D * 4 + B * 4 + param_bytes,
    )

    out = pl.pallas_call(
        _energy_mlp_kernel,
        out_shape=jax.ShapeDtypeStruct((1, B), jnp.float32),
        grid=(n_tiles,),
        in_specs=[
            pl.BlockSpec((tb, D), lambda i: (i, 0)),            # x: streamed row tiles
            pl.BlockSpec((D, H), lambda i: (0, 0)),             # W1: VMEM-resident
            pl.BlockSpec((1, H), lambda i: (0, 0)),             # b1: VMEM-resident
            pl.BlockSpec((1, H), lambda i: (0, 0)),             # W2^T: VMEM-resident
            pl.BlockSpec(memory_space=pltpu.MemorySpace.SMEM),  # b2: scalar in SMEM
        ],
        out_specs=pl.BlockSpec((1, tb), lambda i: (0, i)),       # lane-dense output
        compiler_params=pltpu.CompilerParams(
            dimension_semantics=("parallel",),                   # v7x: 2 TCs over batch
            vmem_limit_bytes=32 * 1024 * 1024,
        ),
        cost_estimate=cost,
    )(x, w1, b1_2d, w2t, b2_2d)

    # Back to the PyTorch-style (B, 1) shape (free row-major reshape).
    return out.reshape(B, 1)


def init_params(key, input_size, hidden):
    """Deterministic parameter init (uniform, like PyTorch nn.Linear default)."""
    k1, k2, k3, k4 = jax.random.split(key, 4)
    bound1 = 1.0 / (input_size ** 0.5)
    bound2 = 1.0 / (hidden ** 0.5)
    w1 = jax.random.uniform(k1, (input_size, hidden), jnp.float32, -bound1, bound1)
    b1 = jax.random.uniform(k2, (1, hidden), jnp.float32, -bound1, bound1)
    w2 = jax.random.uniform(k3, (hidden, 1), jnp.float32, -bound2, bound2)
    b2 = jax.random.uniform(k4, (1, 1), jnp.float32, -bound2, bound2)
    return w1, b1, w2, b2


def _reference(x, w1, b1, w2, b2):
    return jnp.maximum(x @ w1 + b1, 0.0) @ w2 + b2


if __name__ == "__main__":
    key = jax.random.PRNGKey(0)
    kx, kp, kx2 = jax.random.split(key, 3)

    input_size, hidden = 16, 32
    w1, b1, w2, b2 = init_params(kp, input_size, hidden)

    # Tolerance note: everything is f32 end-to-end now; the margin only covers
    # possible MXU f32-emulation pass differences vs. the XLA reference matmul.
    ATOL = RTOL = 1e-2

    # Test 1: small batch -> single full-extent block (no partial-edge path).
    batch = 8
    x = jax.random.normal(kx, (batch, input_size), jnp.float32)
    out = jax.block_until_ready(energy_predictor_forward(x, w1, b1, w2, b2))
    ref = _reference(x, w1, b1, w2, b2)
    assert out.shape == (batch, 1)
    assert jnp.allclose(out, ref, atol=ATOL, rtol=RTOL)

    # Test 2: non-multiple batch -> 2 grid steps with a partial edge block
    # (exercises the no-pad OOB-read / dropped-OOB-write path).
    batch2 = 300
    x2 = jax.random.normal(kx2, (batch2, input_size), jnp.float32)
    out2 = jax.block_until_ready(energy_predictor_forward(x2, w1, b1, w2, b2))
    ref2 = _reference(x2, w1, b1, w2, b2)
    assert out2.shape == (batch2, 1)
    assert jnp.allclose(out2, ref2, atol=ATOL, rtol=RTOL)

    print("KERNEL_OK")
</pallas_src>

<mosaic_0001>
module attributes {stable_mosaic.version = 11 : i64} {
  func.func @_energy_mlp_kernel(%arg0: i32, %arg1: memref<8x16xf32, #tpu.memory_space<vmem>>, %arg2: memref<16x32xf32, #tpu.memory_space<vmem>>, %arg3: memref<1x32xf32, #tpu.memory_space<vmem>>, %arg4: memref<1x32xf32, #tpu.memory_space<vmem>>, %arg5: memref<1x1xf32, #tpu.memory_space<smem>>, %arg6: memref<1x8xf32, #tpu.memory_space<vmem>>) attributes {dimension_semantics = [#tpu.dimension_semantics<parallel>], iteration_bounds = array<i64: 1>, scalar_prefetch = 0 : i64, scratch_operands = 0 : i64, tpu.core_type = #tpu.core_type<tc>, window_params = [{transform_indices = @transform_0, window_bounds = array<i64: 8, 16>}, {pipeline_mode = #tpu.pipeline_mode<synchronous>, transform_indices = @transform_1, window_bounds = array<i64: 16, 32>}, {pipeline_mode = #tpu.pipeline_mode<synchronous>, transform_indices = @transform_2, window_bounds = array<i64: 1, 32>}, {pipeline_mode = #tpu.pipeline_mode<synchronous>, transform_indices = @transform_3, window_bounds = array<i64: 1, 32>}, {transform_indices = @transform_4, window_bounds = array<i64: 1, 1>}, {transform_indices = @transform_5, window_bounds = array<i64: 1, 8>}]} {
    %c0 = arith.constant 0 : index
    %c0_0 = arith.constant 0 : index
    %0 = vector.load %arg1[%c0, %c0_0] : memref<8x16xf32, #tpu.memory_space<vmem>>, vector<8x16xf32>
    %c0_1 = arith.constant 0 : index
    %c0_2 = arith.constant 0 : index
    %1 = vector.load %arg2[%c0_1, %c0_2] : memref<16x32xf32, #tpu.memory_space<vmem>>, vector<16x32xf32>
    %cst = arith.constant dense<0.000000e+00> : vector<8x32xf32>
    %2 = tpu.matmul %0, %1, %cst {dimension_numbers = #tpu.dot_dimension_numbers<[1], [0], [0], [1], [0, 0, 1, 1], [], []>} : vector<8x16xf32>, vector<16x32xf32>, vector<8x32xf32> -> vector<8x32xf32>
    %c0_3 = arith.constant 0 : index
    %c0_4 = arith.constant 0 : index
    %3 = vector.load %arg3[%c0_3, %c0_4] : memref<1x32xf32, #tpu.memory_space<vmem>>, vector<1x32xf32>
    %4 = vector.broadcast %3 : vector<1x32xf32> to vector<8x32xf32>
    %5 = arith.addf %2, %4 : vector<8x32xf32>
    %cst_5 = arith.constant 0.000000e+00 : f32
    %6 = vector.broadcast %cst_5 : f32 to vector<8x32xf32>
    %7 = arith.maximumf %5, %6 : vector<8x32xf32>
    %c0_6 = arith.constant 0 : index
    %c0_7 = arith.constant 0 : index
    %8 = vector.load %arg4[%c0_6, %c0_7] : memref<1x32xf32, #tpu.memory_space<vmem>>, vector<1x32xf32>
    %9 = vector.broadcast %8 : vector<1x32xf32> to vector<8x32xf32>
    %10 = arith.mulf %7, %9 : vector<8x32xf32>
    %cst_8 = arith.constant dense<0.000000e+00> : vector<8xf32>
    %11 = vector.multi_reduction <add>, %10, %cst_8 [1] : vector<8x32xf32> to vector<8xf32>
    %c0_9 = arith.constant 0 : index
    %c0_10 = arith.constant 0 : index
    %12 = memref.load %arg5[%c0_9, %c0_10] : memref<1x1xf32, #tpu.memory_space<smem>>
    %13 = vector.broadcast %12 : f32 to vector<8xf32>
    %14 = arith.addf %11, %13 : vector<8xf32>
    %15 = vector.shape_cast %14 : vector<8xf32> to vector<1x8xf32>
    %c0_11 = arith.constant 0 : index
    %c0_12 = arith.constant 0 : index
    %16 = vector.load %arg6[%c0_11, %c0_12] : memref<1x8xf32, #tpu.memory_space<vmem>>, vector<1x8xf32>
    tpu.vector_store %arg6[%c0_11, %c0_12], %15 {strides = array<i32>} : memref<1x8xf32, #tpu.memory_space<vmem>>, vector<1x8xf32>,
    return
  }
  func.func @transform_0(%arg0: i32) -> (i32, i32) {
    %c0_i32 = arith.constant 0 : i32
    %c0_i32_0 = arith.constant 0 : i32
    return %arg0, %c0_i32 : i32, i32
  }
  func.func @transform_1(%arg0: i32) -> (i32, i32) {
    %c0_i32 = arith.constant 0 : i32
    %c0_i32_0 = arith.constant 0 : i32
    %c0_i32_1 = arith.constant 0 : i32
    return %c0_i32, %c0_i32_0 : i32, i32
  }
  func.func @transform_2(%arg0: i32) -> (i32, i32) {
    %c0_i32 = arith.constant 0 : i32
    %c0_i32_0 = arith.constant 0 : i32
    %c0_i32_1 = arith.constant 0 : i32
    return %c0_i32, %c0_i32_0 : i32, i32
  }
  func.func @transform_3(%arg0: i32) -> (i32, i32) {
    %c0_i32 = arith.constant 0 : i32
    %c0_i32_0 = arith.constant 0 : i32
    %c0_i32_1 = arith.constant 0 : i32
    return %c0_i32, %c0_i32_0 : i32, i32
  }
  func.func @transform_4(%arg0: i32) -> (i32, i32) {
    %c0_i32 = arith.constant 0 : i32
    %c0_i32_0 = arith.constant 0 : i32
    %c0_i32_1 = arith.constant 0 : i32
    return %c0_i32, %c0_i32_0 : i32, i32
  }
  func.func @transform_5(%arg0: i32) -> (i32, i32) {
    %c0_i32 = arith.constant 0 : i32
    %c0_i32_0 = arith.constant 0 : i32
    return %c0_i32, %arg0 : i32, i32
  }
}

</mosaic_0001>

<llo_original>
// kernel: tpu_custom_call.1
$region0: #{tpu_custom_call.1}
  #allocation0 [shape = 'u32[]', space=smem, size = 0x4, offset = 0x4, fixed_abs, tag = 'smem constant byte address 0x4 - core index']
  #allocation1 [shape = 'u32[72,128]{1,0:T(1,128)}', space=vmem, size = 0x9000, scoped, tag = 'internal scratch']
  #allocation2 [shape = 'f32[1,1]{1,0:T(1,128)S(6)}', space=smem, size = 0x200, scoped, tag = 'scoped memory for tpu_custom_call.1']
  %s0 = inlined_call_operand.hbm [shape: f32[8,16], index: 0, kind: input, shape index: {}]
  %s1 = inlined_call_operand.hbm [shape: f32[16,32], index: 1, kind: input, shape index: {}]
  %s2 = inlined_call_operand.vmem [shape: f32[1,32], index: 2, kind: input, shape index: {}]
  %s3 = inlined_call_operand.vmem [shape: f32[1,32], index: 3, kind: input, shape index: {}]
  %s4 = inlined_call_operand.<no memory space> [shape: f32[1,1], index: 4, kind: input, shape index: {}]
  %s5 = inlined_call_operand.hbm [shape: f32[1,8], index: 5, kind: output, shape index: {}]
  %s6 = sld [smem:[#allocation0]]
  $region38: #{tpu_custom_call.1} parent=0
    _
  %s8 = ssub.s32 1, %s6
  %s9 = scalar_select 0, %s8, %s6
  %10 = sst [smem:[#allocation2]] %s4
  $region1: #{tpu_custom_call.1} parent=0
    #allocation3 [shape = 'u8[4096]{0}', space=vmem, size = 0x1000, scoped, tag = 'input window, operand 0, single buffered']
    #allocation4 [shape = 's32[1]{0}', space=sflag, size = 0x4, scoped, tag = 'scoped memory for tpu_custom_call.1']
    #allocation5 [shape = 's32[1]{0}', space=sflag, size = 0x4, scoped, tag = 'scoped memory for tpu_custom_call.1']
    #allocation6 [shape = 'u8[8192]{0}', space=vmem, size = 0x2000, scoped, tag = 'input window, operand 1, single buffered']
    #allocation7 [shape = 's32[1]{0}', space=sflag, size = 0x4, scoped, tag = 'scoped memory for tpu_custom_call.1']
    #allocation8 [shape = 'u8[512]{0}', space=vmem, size = 0x400, scoped, tag = 'output window, operand 0, single buffered']
    %11 = vsyncpa [#allocation4], 0
    %12 = vsyncpa [#allocation7], 0
    %13 = vsyncpa [#allocation5], 0
    // Predicated region
    $region2: #{tpu_custom_call.1} parent=1 // pred_check
      _
    $region3: #{tpu_custom_call.1} parent=1 // pred_check_branch
      %15 = sbr.rel (0) target = $region5
    $region4: #{tpu_custom_call.1} parent=1 // pred_region
      %17 = vsyncadd [#allocation4], 0
      %s19 = sshll.u32 %s0, 4
      %s20 = int_to_ptr.hbm [resolvable:$true] %s19
      %s21 = sshll.u32 [#allocation3], 4
      %s22 = int_to_ptr.vmem [resolvable:$true] %s21
      %24 = dma.hbm_to_vmem [thread:$0]  %s20, 128, %s22, [#allocation4]
    $region5: #{tpu_custom_call.1} parent=1 // pred_fallthru
      _
    // Predicated region
    $region6: #{tpu_custom_call.1} parent=1 // pred_check
      _
    $region7: #{tpu_custom_call.1} parent=1 // pred_check_branch
      %26 = sbr.rel (0) target = $region9
    $region8: #{tpu_custom_call.1} parent=1 // pred_region
      %28 = vsyncadd [#allocation7], 0
      %s29 = sshll.u32 %s1, 4
      %s30 = int_to_ptr.hbm [resolvable:$true] %s29
      %s31 = sshll.u32 [#allocation6], 4
      %s32 = int_to_ptr.vmem [resolvable:$true] %s31
      %37 = dma.hbm_to_vmem [thread:$0]  %s30, 256, %s32, [#allocation7], 128, 128, 8
    $region9: #{tpu_custom_call.1} parent=1 // pred_fallthru
      _
    // Predicated region
    $region10: #{tpu_custom_call.1} parent=1 // pred_check
      _
    $region11: #{tpu_custom_call.1} parent=1 // pred_check_branch
      %39 = sbr.rel (0) target = $region13
    $region12: #{tpu_custom_call.1} parent=1 // pred_region
      _
    $region13: #{tpu_custom_call.1} parent=1 // pred_fallthru
      _
    // Predicated region
    $region14: #{tpu_custom_call.1} parent=1 // pred_check
      _
    $region15: #{tpu_custom_call.1} parent=1 // pred_check_branch
      %41 = sbr.rel (0) target = $region17
    $region16: #{tpu_custom_call.1} parent=1 // pred_region
      _
    $region17: #{tpu_custom_call.1} parent=1 // pred_fallthru
      _
    // Predicated region
    $region18: #{tpu_custom_call.1} parent=1 // pred_check
      _
    $region19: #{tpu_custom_call.1} parent=1 // pred_check_branch
      %43 = sbr.rel (0) target = $region21
    $region20: #{tpu_custom_call.1} parent=1 // pred_region
      _
    $region21: #{tpu_custom_call.1} parent=1 // pred_fallthru
      _
    // Predicated region
    $region22: #{tpu_custom_call.1} parent=1 // pred_check
      _
    $region23: #{tpu_custom_call.1} parent=1 // pred_check_branch
      %45 = sbr.rel (0) target = $region25
    $region24: #{tpu_custom_call.1} parent=1 // pred_region
      %47 = dma.done [#allocation4], 128
    $region25: #{tpu_custom_call.1} parent=1 // pred_fallthru
      _
    // Predicated region
    $region26: #{tpu_custom_call.1} parent=1 // pred_check
      _
    $region27: #{tpu_custom_call.1} parent=1 // pred_check_branch
      %49 = sbr.rel (0) target = $region29
    $region28: #{tpu_custom_call.1} parent=1 // pred_region
      %51 = dma.done [#allocation7], 256
    $region29: #{tpu_custom_call.1} parent=1 // pred_fallthru
      _
    %v52 = vld [vmem:[#allocation3] sm:$0xff]
    %v53 = vld [vmem:[#allocation6] sm:$0xff]
    %v54 = vld [vmem:[#allocation6 + $0x8] sm:$0xff]
    %v55 = vld [vmem:[%s2] sm:$0x1]
    %v57 = vperm.slane %v55, 0
    %vm59 = vcmask 130048
    %v61 = vsel %vm59, %v52, 0
    %63 = vmatpush.msra.mxu0 0.0
    %64 = vmatpush.msra.mxu0 0.0
    %65 = vmatpush.msra.mxu0 0.0
    %66 = vmatpush.msra.mxu0 0.0
    %67 = vmatpush.msra.mxu0 0.0
    %68 = vmatpush.msra.mxu0 0.0
    %69 = vmatpush.msra.mxu0 0.0
    %70 = vmatpush.msra.mxu0 0.0
    %71 = vmatpush.msra.mxu0 0.0
    %72 = vmatpush.msra.mxu0 0.0
    %73 = vmatpush.msra.mxu0 0.0
    %74 = vmatpush.msra.mxu0 0.0
    %75 = vmatpush.msra.mxu0 0.0
    %76 = vmatpush.msra.mxu0 0.0
    %77 = vmatpush.msra.mxu0 %v54
    %78 = vmatpush.msra.mxu0 %v53
    %79 = vmatmul.f32.gmra.mxu0 %v61
    %v80 = vpop.f32.mrf.mxu0
    %v81 = vadd.f32 %v57, %v80
    %82 = vdwg.mxu0
    %v83 = vmax.f32 %v81, 0.0
    %v84 = vld [vmem:[%s3] sm:$0x1]
    %v86 = vperm.slane %v84, 0
    %v88 = vmul.f32 %v83, %v86
    %vm89 = vcmask 261120
    %v90 = vsel %vm89, %v88, 0.0
    %91 = vadd.xlane.f32.xlu0 %v90
    %v92 = vpop.xlane.xlu0 %91
    %s93 = sld [smem:[#allocation2]]
    %v94 = vstv %s93
    %v95 = vadd.f32 %v92, %v94
    %v97 = vlaneseq
    %v98 = vand.u32 %v97, 127
    %v99 = vperm.slane %v95, %v98
    %vm101 = vcmask 57344
    %102 = vst.msk [vmem:[#allocation8] sm:$0x1] %vm101, %v99
    // Predicated region
    $region30: #{tpu_custom_call.1} parent=1 // pred_check
      _
    $region31: #{tpu_custom_call.1} parent=1 // pred_check_branch
      %104 = sbr.rel (0) target = $region33
    $region32: #{tpu_custom_call.1} parent=1 // pred_region
      %106 = vsyncadd [#allocation5], 0
      %s108 = sshll.u32 [#allocation8], 4
      %s109 = int_to_ptr.vmem [resolvable:$true] %s108
      %s110 = sshll.u32 %s5, 4
      %s111 = int_to_ptr.hbm [resolvable:$true] %s110
      %113 = dma.vmem_to_hbm [thread:$0]  %s109, 16, %s111, [#allocation5]
    $region33: #{tpu_custom_call.1} parent=1 // pred_fallthru
      _
    // Predicated region
    $region34: #{tpu_custom_call.1} parent=1 // pred_check
      _
    $region35: #{tpu_custom_call.1} parent=1 // pred_check_branch
      %115 = sbr.rel (0) target = $region37
    $region36: #{tpu_custom_call.1} parent=1 // pred_region
      %117 = dma.done [#allocation5], 16
    $region37: #{tpu_custom_call.1} parent=1 // pred_fallthru
      _
    %118 = vsyncpa [#allocation4], 1
    %119 = vsyncpa [#allocation7], 1
    %120 = vsyncpa [#allocation5], 1

</llo_original>
